<compile_context>
chip_gen: v7x
topology: tpu7x:2x2x1
jax: 0.10.0
libtpu: 0.0.40
codegen_flags: <defaults>
</compile_context>

<pallas_src>
import functools

import jax
import jax.numpy as jnp
from jax.experimental import pallas as pl
from jax.experimental.pallas import tpu as pltpu

# ------------------------- module-consistent sizes -------------------------
INPUT_SIZE = 8            # X.shape[1] stand-in (CSV not available; synthetic)
EMBED_DIM = 2             # in_dim of the MPS / poly embedding width [1, x]
BOND_DIM = 4
MPS_OUT_DIM = 8
HIDDEN = 24
OUTPUT_DIM = 1
BATCH = 8

N_FEATURES = INPUT_SIZE + 1             # MPS sites (extra output site)
OUT_POS = N_FEATURES // 2               # tensorkrowch MPSLayer default out_position
N_LEFT_INT = OUT_POS - 1                # interior input sites left of the output core
N_RIGHT_INT = INPUT_SIZE - OUT_POS - 1  # interior input sites right of the output core
N_STEPS = max(N_LEFT_INT, N_RIGHT_INT)  # combined (interleaved) interior steps
assert N_STEPS >= 2

DBOND = 2 * BOND_DIM                    # 8  : [L | R] sublanes
QBOND = 4 * BOND_DIM                    # 16 : [L | R | x_l*L | x_r*R] sublanes


# ------------------------------------ kernel --------------------------------------
def mps_dense_kernel(xt_ref, bnd0_ref, bnd1_ref, st_ref, qt_ref, b12_ref,
                     out_ref, *, n_mid):
    """Batch-on-lanes MPS contraction.

    xt_ref   : (INPUT_SIZE, tb)  transposed raw features (batch on lanes)
    bnd0/1   : (8, 1)            OBC boundary cores, [L | R] on sublanes
    st_ref   : (n_mid, 8, 16)    transposed interleaved interior step matrices
    qt_ref   : (16, 16)          last step + output core + folded dense head (Q^T)
    b12_ref  : (1, 1) SMEM       folded dense-head bias
    out_ref  : (1, tb)           lane-dense result row
    """
    f32 = jnp.float32
    tb = xt_ref.shape[1]
    left_half = jax.lax.broadcasted_iota(jnp.int32, (DBOND, tb), 0) < BOND_DIM

    def feat(f):
        # Sublane-broadcast feature row f of x^T to (8, tb); zeros when the side
        # does not exist (asymmetric left/right sweeps).
        if f is None:
            return jnp.zeros((DBOND, tb), f32)
        return jnp.broadcast_to(xt_ref[f:f + 1, :], (DBOND, tb))

    def lane_pair(fl, fr):
        # rows 0..3 = x[fl], rows 4..7 = x[fr]
        return jnp.where(left_half, feat(fl), feat(fr))

    def step_feats(s):
        fl = s + 1 if s < N_LEFT_INT else None
        fr = INPUT_SIZE - 2 - s if s < N_RIGHT_INT else None
        return lane_pair(fl, fr)

    # Initial [L | R] from the two OBC boundary cores and the edge features.
    xedge = lane_pair(0, INPUT_SIZE - 1)
    lr = bnd0_ref[...] + xedge * bnd1_ref[...]                      # (8, tb)
    v = jnp.concatenate([lr, lr * step_feats(0)], axis=0)           # (16, tb)

    # Interleaved left/right interior sweeps: one (8,16)@(16,tb) MXU matmul,
    # one VPU multiply and one tile-aligned sublane concat per step.
    for s in range(n_mid):
        lr = jnp.dot(st_ref[s], v, preferred_element_type=f32)      # (8, tb)
        v = jnp.concatenate([lr, lr * step_feats(s + 1)], axis=0)   # (16, tb)

    # Last interior step + output core + folded dense head as a quadratic form:
    #   y[b] = v[b] @ (slast @ slastp^T) @ v[b]^T + b12
    q = jnp.dot(qt_ref[...], v, preferred_element_type=f32)         # (16, tb)
    out_ref[...] = jnp.sum(q * v, axis=0, keepdims=True) + b12_ref[0, 0]


# -------------------------------- glue: weights ------------------------------------
def _blockdiag(a, b):
    z = jnp.zeros_like(a)
    return jnp.concatenate(
        [jnp.concatenate([a, z], axis=1),
         jnp.concatenate([z, b], axis=1)], axis=0)          # (2*BOND, 2*BOND)


def pack_params(params):
    """Weight-only packing (call once; results are reused across forwards)."""
    left_core, mids, right_core, out_core, w1, b1, w2, b2 = params
    eye = jnp.eye(BOND_DIM, dtype=jnp.float32)
    zero = jnp.zeros((BOND_DIM, BOND_DIM), jnp.float32)

    with jax.default_matmul_precision("float32"):
        s_list = []
        for s in range(N_STEPS):
            # Left interior step s: feature s+1, core mids[s].
            la0, la1 = ((mids[s, :, 0, :], mids[s, :, 1, :])
                        if s < N_LEFT_INT else (eye, zero))
            # Right interior step s: feature INPUT_SIZE-2-s, core mids[INPUT_SIZE-3-s],
            # contracted from the right -> transposed. Identity-padded if asymmetric.
            if s < N_RIGHT_INT:
                idx = INPUT_SIZE - 3 - s
                ra0, ra1 = mids[idx, :, 0, :].T, mids[idx, :, 1, :].T
            else:
                ra0, ra1 = eye, zero
            a0 = _blockdiag(la0, ra0)                         # (8, 8)
            a1 = _blockdiag(la1, ra1)                         # (8, 8)
            s_list.append(jnp.concatenate([a0, a1], axis=0))  # (16, 8)

        # Transposed interior step matrices for the batch-on-lanes layout.
        st = jnp.stack([s_list[s].T for s in range(N_STEPS - 1)], axis=0)  # (n_mid,8,16)

        # Fold the activation-free dense head into the output core, then fuse the
        # last interior step + output phase into one quadratic form:
        #   y = L @ Mlr @ R^T + b12,   Q = slast @ slastp^T,   qt = Q^T
        w12 = w1 @ w2                                         # (8, 1)
        b12 = (b1 @ w2 + b2).astype(jnp.float32)              # (1, 1)
        t2 = jnp.transpose(out_core, (0, 2, 1)).reshape(BOND_DIM * BOND_DIM,
                                                        MPS_OUT_DIM)
        mlr = (t2 @ w12).reshape(BOND_DIM, BOND_DIM)          # (4, 4)
        proj = jnp.zeros((DBOND, DBOND), jnp.float32).at[:BOND_DIM, BOND_DIM:].set(mlr)
        slast = s_list[N_STEPS - 1]                           # (16, 8) -> [L | R]
        slastp = slast @ proj                                 # (16, 8) -> [0 | L@Mlr]
        qt = slastp @ slast.T                                 # (16, 16) = Q^T

    # OBC boundary cores on sublanes: [L | R] columns.
    bnd0 = jnp.concatenate([left_core[0, :], right_core[:, 0]])[:, None]   # (8, 1)
    bnd1 = jnp.concatenate([left_core[1, :], right_core[:, 1]])[:, None]   # (8, 1)
    return bnd0, bnd1, st, qt, b12


# ------------------------------------ wrapper --------------------------------------
def _choose_tile(b_pad):
    # Prefer the largest tile (up to 1024 lanes) that still gives >= 2 grid steps,
    # so dimension_semantics=("parallel",) can shard across both v7x TensorCores.
    for cand in (1024, 512, 256, 128):
        if b_pad % cand == 0 and b_pad // cand >= 2:
            return cand
    return b_pad                       # single-tile case (b_pad == 128)


@jax.jit
def _forward(x, bnd0, bnd1, st, qt, b12):
    B = x.shape[0]
    B_pad = ((B + 127) // 128) * 128   # pad batch to a lane multiple (never tb = B)
    tb = _choose_tile(B_pad)
    n_mid = st.shape[0]

    # Raw input only: (B, F) -> padded (F, B_pad), batch on lanes.  ~32 B/row.
    xt = jnp.zeros((INPUT_SIZE, B_pad), jnp.float32).at[:, :B].set(
        x.astype(jnp.float32).T)

    kernel = functools.partial(mps_dense_kernel, n_mid=n_mid)
    out = pl.pallas_call(
        kernel,
        out_shape=jax.ShapeDtypeStruct((1, B_pad), jnp.float32),
        grid=(B_pad // tb,),
        in_specs=[
            pl.BlockSpec((INPUT_SIZE, tb), lambda i: (0, i)),          # x^T
            pl.BlockSpec((DBOND, 1), lambda i: (0, 0)),                # bnd0
            pl.BlockSpec((DBOND, 1), lambda i: (0, 0)),                # bnd1
            pl.BlockSpec((n_mid, DBOND, QBOND), lambda i: (0, 0, 0)),  # st
            pl.BlockSpec((QBOND, QBOND), lambda i: (0, 0)),            # qt
            pl.BlockSpec(memory_space=pltpu.MemorySpace.SMEM),         # b12 scalar
        ],
        out_specs=pl.BlockSpec((1, tb), lambda i: (0, i)),             # lane-dense
        compiler_params=pltpu.CompilerParams(dimension_semantics=("parallel",)),
    )(xt, bnd0, bnd1, st, qt, b12)

    return out[0, :B][:, None]                                          # (B, 1)


def mps_with_dense_bond3(x, packed):
    """packed = pack_params(params); packing is hoisted out of the forward path."""
    return _forward(x, *packed)


# -------------------------- deterministic synthetic parameters ---------------------
def make_params(key):
    ks = jax.random.split(key, 8)
    std = 0.1
    # Left boundary core (in_dim, bond): 'randn_eye'-flavoured init.
    left_core = std * jax.random.normal(ks[0], (EMBED_DIM, BOND_DIM), jnp.float32)
    left_core = left_core.at[0, 0].add(1.0)
    # Interior input cores (bond, in_dim, bond): identity on the d=0 slice + noise.
    mids = std * jax.random.normal(ks[1], (INPUT_SIZE - 2, BOND_DIM, EMBED_DIM, BOND_DIM),
                                   jnp.float32)
    mids = mids.at[:, :, 0, :].add(jnp.eye(BOND_DIM, dtype=jnp.float32))
    # Right boundary core (bond, in_dim).
    right_core = std * jax.random.normal(ks[2], (BOND_DIM, EMBED_DIM), jnp.float32)
    right_core = right_core.at[0, 0].add(1.0)
    # Output core (bond, out_dim, bond).
    out_core = std * jax.random.normal(ks[3], (BOND_DIM, MPS_OUT_DIM, BOND_DIM), jnp.float32)
    out_core = out_core + (jnp.eye(BOND_DIM, dtype=jnp.float32)[:, None, :]
                           * (1.0 + 0.1 * jnp.arange(MPS_OUT_DIM, dtype=jnp.float32))[None, :, None])
    # Dense head (no activation between the two linears, matching the PyTorch module).
    w1 = jax.random.normal(ks[4], (MPS_OUT_DIM, HIDDEN), jnp.float32) / jnp.sqrt(float(MPS_OUT_DIM))
    b1 = 0.1 * jax.random.normal(ks[5], (1, HIDDEN), jnp.float32)
    w2 = jax.random.normal(ks[6], (HIDDEN, OUTPUT_DIM), jnp.float32) / jnp.sqrt(float(HIDDEN))
    b2 = 0.1 * jax.random.normal(ks[7], (1, OUTPUT_DIM), jnp.float32)
    return (left_core, mids, right_core, out_core, w1, b1, w2, b2)


# ------------------------------ pure-JAX reference ---------------------------------
def reference_forward(x, params):
    (left_core, mids, right_core, out_core, w1, b1, w2, b2) = params
    emb = jnp.stack([jnp.ones_like(x), x], axis=-1)           # (B, F, 2): poly degree 1
    with jax.default_matmul_precision("float32"):
        L = jnp.einsum('bd,dr->br', emb[:, 0], left_core)
        for j in range(N_LEFT_INT):
            L = jnp.einsum('bl,ldr,bd->br', L, mids[j], emb[:, j + 1])
        R = jnp.einsum('rd,bd->br', right_core, emb[:, INPUT_SIZE - 1])
        for k in range(N_RIGHT_INT):
            site = N_FEATURES - 2 - k
            feat = site - 1
            R = jnp.einsum('ldr,bd,br->bl', mids[site - 2], emb[:, feat], R)
        y8 = jnp.einsum('bl,lor,br->bo', L, out_core, R)
        h = y8 @ w1 + b1
        return h @ w2 + b2


# --------------------------------------- main ---------------------------------------
if __name__ == "__main__":
    key = jax.random.PRNGKey(0)
    kx, kp = jax.random.split(key)
    x = jax.random.normal(kx, (BATCH, INPUT_SIZE), jnp.float32)
    params = make_params(kp)

    packed = pack_params(params)          # one-time weight packing (not per forward)

    out = jax.block_until_ready(mps_with_dense_bond3(x, packed))
    ref = jax.block_until_ready(reference_forward(x, params))
    assert out.shape == (BATCH, OUTPUT_DIM)
    assert jnp.allclose(out, ref, rtol=1e-3, atol=1e-3), (out, ref)

    print("KERNEL_OK")
</pallas_src>

<mosaic_0001>
module attributes {stable_mosaic.version = 11 : i64} {
  func.func @mps_dense_kernel(%arg0: i32, %arg1: memref<8x128xf32, #tpu.memory_space<vmem>>, %arg2: memref<8x1xf32, #tpu.memory_space<vmem>>, %arg3: memref<8x1xf32, #tpu.memory_space<vmem>>, %arg4: memref<2x8x16xf32, #tpu.memory_space<vmem>>, %arg5: memref<16x16xf32, #tpu.memory_space<vmem>>, %arg6: memref<1x1xf32, #tpu.memory_space<smem>>, %arg7: memref<1x128xf32, #tpu.memory_space<vmem>>) attributes {dimension_semantics = [#tpu.dimension_semantics<parallel>], iteration_bounds = array<i64: 1>, scalar_prefetch = 0 : i64, scratch_operands = 0 : i64, tpu.core_type = #tpu.core_type<tc>, window_params = [{transform_indices = @transform_0, window_bounds = array<i64: 8, 128>}, {pipeline_mode = #tpu.pipeline_mode<synchronous>, transform_indices = @transform_1, window_bounds = array<i64: 8, 1>}, {pipeline_mode = #tpu.pipeline_mode<synchronous>, transform_indices = @transform_2, window_bounds = array<i64: 8, 1>}, {pipeline_mode = #tpu.pipeline_mode<synchronous>, transform_indices = @transform_3, window_bounds = array<i64: 2, 8, 16>}, {pipeline_mode = #tpu.pipeline_mode<synchronous>, transform_indices = @transform_4, window_bounds = array<i64: 16, 16>}, {transform_indices = @transform_5, window_bounds = array<i64: 1, 1>}, {transform_indices = @transform_6, window_bounds = array<i64: 1, 128>}]} {
    %0 = tpu.iota {dimensions = array<i32: 0>} : vector<8x128xi32>
    %c4_i32 = arith.constant 4 : i32
    %1 = vector.broadcast %c4_i32 : i32 to vector<8x128xi32>
    %2 = arith.cmpi slt, %0, %1 : vector<8x128xi32>
    %c0 = arith.constant 0 : index
    %c0_0 = arith.constant 0 : index
    %3 = vector.load %arg1[%c0, %c0_0] : memref<8x128xf32, #tpu.memory_space<vmem>>, vector<1x128xf32>
    %4 = vector.shape_cast %3 : vector<1x128xf32> to vector<1x128xf32>
    %5 = vector.broadcast %4 : vector<1x128xf32> to vector<8x128xf32>
    %c7 = arith.constant 7 : index
    %c0_1 = arith.constant 0 : index
    %6 = vector.load %arg1[%c7, %c0_1] : memref<8x128xf32, #tpu.memory_space<vmem>>, vector<1x128xf32>
    %7 = vector.shape_cast %6 : vector<1x128xf32> to vector<1x128xf32>
    %8 = vector.broadcast %7 : vector<1x128xf32> to vector<8x128xf32>
    %9 = arith.select %2, %5, %8 : vector<8x128xi1>, vector<8x128xf32>
    %c0_2 = arith.constant 0 : index
    %c0_3 = arith.constant 0 : index
    %10 = vector.load %arg2[%c0_2, %c0_3] : memref<8x1xf32, #tpu.memory_space<vmem>>, vector<8x1xf32>
    %c0_4 = arith.constant 0 : index
    %c0_5 = arith.constant 0 : index
    %11 = vector.load %arg3[%c0_4, %c0_5] : memref<8x1xf32, #tpu.memory_space<vmem>>, vector<8x1xf32>
    %12 = vector.broadcast %11 : vector<8x1xf32> to vector<8x128xf32>
    %13 = arith.mulf %9, %12 : vector<8x128xf32>
    %14 = vector.broadcast %10 : vector<8x1xf32> to vector<8x128xf32>
    %15 = arith.addf %14, %13 : vector<8x128xf32>
    %c1 = arith.constant 1 : index
    %c0_6 = arith.constant 0 : index
    %16 = vector.load %arg1[%c1, %c0_6] : memref<8x128xf32, #tpu.memory_space<vmem>>, vector<1x128xf32>
    %17 = vector.shape_cast %16 : vector<1x128xf32> to vector<1x128xf32>
    %18 = vector.broadcast %17 : vector<1x128xf32> to vector<8x128xf32>
    %c6 = arith.constant 6 : index
    %c0_7 = arith.constant 0 : index
    %19 = vector.load %arg1[%c6, %c0_7] : memref<8x128xf32, #tpu.memory_space<vmem>>, vector<1x128xf32>
    %20 = vector.shape_cast %19 : vector<1x128xf32> to vector<1x128xf32>
    %21 = vector.broadcast %20 : vector<1x128xf32> to vector<8x128xf32>
    %22 = arith.select %2, %18, %21 : vector<8x128xi1>, vector<8x128xf32>
    %23 = arith.mulf %15, %22 : vector<8x128xf32>
    %24 = tpu.concatenate %15, %23 in 0 : vector<8x128xf32>, vector<8x128xf32> -> vector<16x128xf32>
    %c0_8 = arith.constant 0 : index
    %c0_9 = arith.constant 0 : index
    %c0_10 = arith.constant 0 : index
    %25 = vector.load %arg4[%c0_8, %c0_9, %c0_10] : memref<2x8x16xf32, #tpu.memory_space<vmem>>, vector<1x8x16xf32>
    %26 = vector.shape_cast %25 : vector<1x8x16xf32> to vector<8x16xf32>
    %cst = arith.constant dense<0.000000e+00> : vector<8x128xf32>
    %27 = tpu.matmul %26, %24, %cst {dimension_numbers = #tpu.dot_dimension_numbers<[1], [0], [0], [1], [0, 0, 1, 1], [], []>} : vector<8x16xf32>, vector<16x128xf32>, vector<8x128xf32> -> vector<8x128xf32>
    %c2 = arith.constant 2 : index
    %c0_11 = arith.constant 0 : index
    %28 = vector.load %arg1[%c2, %c0_11] : memref<8x128xf32, #tpu.memory_space<vmem>>, vector<1x128xf32>
    %29 = vector.shape_cast %28 : vector<1x128xf32> to vector<1x128xf32>
    %30 = vector.broadcast %29 : vector<1x128xf32> to vector<8x128xf32>
    %c5 = arith.constant 5 : index
    %c0_12 = arith.constant 0 : index
    %31 = vector.load %arg1[%c5, %c0_12] : memref<8x128xf32, #tpu.memory_space<vmem>>, vector<1x128xf32>
    %32 = vector.shape_cast %31 : vector<1x128xf32> to vector<1x128xf32>
    %33 = vector.broadcast %32 : vector<1x128xf32> to vector<8x128xf32>
    %34 = arith.select %2, %30, %33 : vector<8x128xi1>, vector<8x128xf32>
    %35 = arith.mulf %27, %34 : vector<8x128xf32>
    %36 = tpu.concatenate %27, %35 in 0 : vector<8x128xf32>, vector<8x128xf32> -> vector<16x128xf32>
    %c1_13 = arith.constant 1 : index
    %c0_14 = arith.constant 0 : index
    %c0_15 = arith.constant 0 : index
    %37 = vector.load %arg4[%c1_13, %c0_14, %c0_15] : memref<2x8x16xf32, #tpu.memory_space<vmem>>, vector<1x8x16xf32>
    %38 = vector.shape_cast %37 : vector<1x8x16xf32> to vector<8x16xf32>
    %cst_16 = arith.constant dense<0.000000e+00> : vector<8x128xf32>
    %39 = tpu.matmul %38, %36, %cst_16 {dimension_numbers = #tpu.dot_dimension_numbers<[1], [0], [0], [1], [0, 0, 1, 1], [], []>} : vector<8x16xf32>, vector<16x128xf32>, vector<8x128xf32> -> vector<8x128xf32>
    %c3 = arith.constant 3 : index
    %c0_17 = arith.constant 0 : index
    %40 = vector.load %arg1[%c3, %c0_17] : memref<8x128xf32, #tpu.memory_space<vmem>>, vector<1x128xf32>
    %41 = vector.shape_cast %40 : vector<1x128xf32> to vector<1x128xf32>
    %42 = vector.broadcast %41 : vector<1x128xf32> to vector<8x128xf32>
    %c4 = arith.constant 4 : index
    %c0_18 = arith.constant 0 : index
    %43 = vector.load %arg1[%c4, %c0_18] : memref<8x128xf32, #tpu.memory_space<vmem>>, vector<1x128xf32>
    %44 = vector.shape_cast %43 : vector<1x128xf32> to vector<1x128xf32>
    %45 = vector.broadcast %44 : vector<1x128xf32> to vector<8x128xf32>
    %46 = arith.select %2, %42, %45 : vector<8x128xi1>, vector<8x128xf32>
    %47 = arith.mulf %39, %46 : vector<8x128xf32>
    %48 = tpu.concatenate %39, %47 in 0 : vector<8x128xf32>, vector<8x128xf32> -> vector<16x128xf32>
    %c0_19 = arith.constant 0 : index
    %c0_20 = arith.constant 0 : index
    %49 = vector.load %arg5[%c0_19, %c0_20] : memref<16x16xf32, #tpu.memory_space<vmem>>, vector<16x16xf32>
    %cst_21 = arith.constant dense<0.000000e+00> : vector<16x128xf32>
    %50 = tpu.matmul %49, %48, %cst_21 {dimension_numbers = #tpu.dot_dimension_numbers<[1], [0], [0], [1], [0, 0, 1, 1], [], []>} : vector<16x16xf32>, vector<16x128xf32>, vector<16x128xf32> -> vector<16x128xf32>
    %51 = arith.mulf %50, %48 : vector<16x128xf32>
    %cst_22 = arith.constant dense<0.000000e+00> : vector<128xf32>
    %52 = vector.multi_reduction <add>, %51, %cst_22 [0] : vector<16x128xf32> to vector<128xf32>
    %53 = vector.shape_cast %52 : vector<128xf32> to vector<1x128xf32>
    %c0_23 = arith.constant 0 : index
    %c0_24 = arith.constant 0 : index
    %54 = memref.load %arg6[%c0_23, %c0_24] : memref<1x1xf32, #tpu.memory_space<smem>>
    %55 = vector.broadcast %54 : f32 to vector<1x128xf32>
    %56 = arith.addf %53, %55 : vector<1x128xf32>
    %c0_25 = arith.constant 0 : index
    %c0_26 = arith.constant 0 : index
    %57 = vector.load %arg7[%c0_25, %c0_26] : memref<1x128xf32, #tpu.memory_space<vmem>>, vector<1x128xf32>
    tpu.vector_store %arg7[%c0_25, %c0_26], %56 {strides = array<i32>} : memref<1x128xf32, #tpu.memory_space<vmem>>, vector<1x128xf32>,
    return
  }
  func.func @transform_0(%arg0: i32) -> (i32, i32) {
    %c0_i32 = arith.constant 0 : i32
    %c0_i32_0 = arith.constant 0 : i32
    return %c0_i32, %arg0 : i32, i32
  }
  func.func @transform_1(%arg0: i32) -> (i32, i32) {
    %c0_i32 = arith.constant 0 : i32
    %c0_i32_0 = arith.constant 0 : i32
    %c0_i32_1 = arith.constant 0 : i32
    return %c0_i32, %c0_i32_0 : i32, i32
  }
  func.func @transform_2(%arg0: i32) -> (i32, i32) {
    %c0_i32 = arith.constant 0 : i32
    %c0_i32_0 = arith.constant 0 : i32
    %c0_i32_1 = arith.constant 0 : i32
    return %c0_i32, %c0_i32_0 : i32, i32
  }
  func.func @transform_3(%arg0: i32) -> (i32, i32, i32) {
    %c0_i32 = arith.constant 0 : i32
    %c0_i32_0 = arith.constant 0 : i32
    %c0_i32_1 = arith.constant 0 : i32
    %c0_i32_2 = arith.constant 0 : i32
    return %c0_i32, %c0_i32_0, %c0_i32_1 : i32, i32, i32
  }
  func.func @transform_4(%arg0: i32) -> (i32, i32) {
    %c0_i32 = arith.constant 0 : i32
    %c0_i32_0 = arith.constant 0 : i32
    %c0_i32_1 = arith.constant 0 : i32
    return %c0_i32, %c0_i32_0 : i32, i32
  }
  func.func @transform_5(%arg0: i32) -> (i32, i32) {
    %c0_i32 = arith.constant 0 : i32
    %c0_i32_0 = arith.constant 0 : i32
    %c0_i32_1 = arith.constant 0 : i32
    return %c0_i32, %c0_i32_0 : i32, i32
  }
  func.func @transform_6(%arg0: i32) -> (i32, i32) {
    %c0_i32 = arith.constant 0 : i32
    %c0_i32_0 = arith.constant 0 : i32
    return %c0_i32, %arg0 : i32, i32
  }
}

</mosaic_0001>

<llo_original>
// kernel: _forward.1
$region0: #{_forward.1}
  #allocation0 [shape = 'u32[]', space=smem, size = 0x4, offset = 0x4, fixed_abs, tag = 'smem constant byte address 0x4 - core index']
  #allocation1 [shape = 'u32[144,128]{1,0:T(1,128)}', space=vmem, size = 0x12000, scoped, tag = 'internal scratch']
  #allocation2 [shape = 'f32[1,1]{1,0:T(1,128)S(6)}', space=smem, size = 0x200, scoped, tag = 'scoped memory for _forward.1']
  %s0 = inlined_call_operand.vmem [shape: f32[8,128], index: 0, kind: input, shape index: {}]
  %s1 = inlined_call_operand.vmem [shape: f32[8,1], index: 1, kind: input, shape index: {}]
  %s2 = inlined_call_operand.vmem [shape: f32[8,1], index: 2, kind: input, shape index: {}]
  %s3 = inlined_call_operand.vmem [shape: f32[2,8,16], index: 3, kind: input, shape index: {}]
  %s4 = inlined_call_operand.vmem [shape: f32[16,16], index: 4, kind: input, shape index: {}]
  %s5 = inlined_call_operand.<no memory space> [shape: f32[1,1], index: 5, kind: input, shape index: {}]
  %s6 = inlined_call_operand.vmem [shape: f32[1,128], index: 6, kind: output, shape index: {}]
  %s7 = sld [smem:[#allocation0]]
  $region34: #{_forward.1} parent=0
    _
  %s9 = ssub.s32 1, %s7
  %s10 = scalar_select 0, %s9, %s7
  %11 = sst [smem:[#allocation2]] %s5
  // Predicated region
  $region2: #{_forward.1} parent=0 // pred_check
    _
  $region3: #{_forward.1} parent=0 // pred_check_branch
    %13 = sbr.rel (0) target = $region5
  $region4: #{_forward.1} parent=0 // pred_region
    _
  $region5: #{_forward.1} parent=0 // pred_fallthru
    _
  // Predicated region
  $region6: #{_forward.1} parent=0 // pred_check
    _
  $region7: #{_forward.1} parent=0 // pred_check_branch
    %15 = sbr.rel (0) target = $region9
  $region8: #{_forward.1} parent=0 // pred_region
    _
  $region9: #{_forward.1} parent=0 // pred_fallthru
    _
  // Predicated region
  $region10: #{_forward.1} parent=0 // pred_check
    _
  $region11: #{_forward.1} parent=0 // pred_check_branch
    %17 = sbr.rel (0) target = $region13
  $region12: #{_forward.1} parent=0 // pred_region
    _
  $region13: #{_forward.1} parent=0 // pred_fallthru
    _
  // Predicated region
  $region14: #{_forward.1} parent=0 // pred_check
    _
  $region15: #{_forward.1} parent=0 // pred_check_branch
    %19 = sbr.rel (0) target = $region17
  $region16: #{_forward.1} parent=0 // pred_region
    _
  $region17: #{_forward.1} parent=0 // pred_fallthru
    _
  // Predicated region
  $region18: #{_forward.1} parent=0 // pred_check
    _
  $region19: #{_forward.1} parent=0 // pred_check_branch
    %21 = sbr.rel (0) target = $region21
  $region20: #{_forward.1} parent=0 // pred_region
    _
  $region21: #{_forward.1} parent=0 // pred_fallthru
    _
  // Predicated region
  $region22: #{_forward.1} parent=0 // pred_check
    _
  $region23: #{_forward.1} parent=0 // pred_check_branch
    %23 = sbr.rel (0) target = $region25
  $region24: #{_forward.1} parent=0 // pred_region
    _
  $region25: #{_forward.1} parent=0 // pred_fallthru
    _
  %v24 = vlaneseq
  %v25 = vshrl.u32 %v24, 7
  %vm26 = vcmp.lt.s32.totalorder %v25, 4
  %v27 = vld [vmem:[%s0] sm:$0x1]
  %v28 = vlaneseq
  %v29 = vshrl.u32 %v28, 7
  %v30 = vsub.s32 0, %v29
  %v31 = vrot.slane %v27, %v30
  %v32 = vld [vmem:[%s0 + $0x7] sm:$0x1]
  %v33 = vlaneseq
  %v34 = vshrl.u32 %v33, 7
  %v35 = vsub.s32 0, %v34
  %v36 = vrot.slane %v32, %v35
  %v37 = vsel %vm26, %v31, %v36
  %v38 = vld [vmem:[%s1] sm:$0xff]
  %v39 = vld [vmem:[%s2] sm:$0xff]
  %41 = vset.pattern.permute.xlu0 0
  %42 = vperm.xlu0 %41, %v39
  %v43 = vpop.permute.xlu0 %42
  %v45 = vmul.f32 %v37, %v43
  %47 = vset.pattern.permute.xlu0 0
  %48 = vperm.xlu0 %47, %v38
  %v49 = vpop.permute.xlu0 %48
  %v51 = vadd.f32 %v49, %v45
  %v52 = vld [vmem:[%s0 + $0x1] sm:$0x1]
  %v53 = vlaneseq
  %v54 = vshrl.u32 %v53, 7
  %v55 = vsub.s32 0, %v54
  %v56 = vrot.slane %v52, %v55
  %v57 = vld [vmem:[%s0 + $0x6] sm:$0x1]
  %v58 = vlaneseq
  %v59 = vshrl.u32 %v58, 7
  %v60 = vsub.s32 0, %v59
  %v61 = vrot.slane %v57, %v60
  %v62 = vsel %vm26, %v56, %v61
  %v63 = vmul.f32 %v51, %v62
  %v64 = vld [vmem:[%s3] sm:$0xff]
  %vm65 = vcmask 130048
  %v67 = vsel %vm65, %v64, 0
  %69 = vmatprep.subr.mxu0 0.0
  %70 = vmatpush1.msra.mxu0 %v51
  %71 = vmatprep.subr.mxu0 0.0
  %72 = vmatpush1.msra.mxu0 %v63
  %73 = vmatprep.subr.mxu0 0.0
  %74 = vmatpush1.msra.mxu0 0.0
  %75 = vmatprep.subr.mxu0 0.0
  %76 = vmatpush1.msra.mxu0 0.0
  %77 = vmatprep.subr.mxu0 0.0
  %78 = vmatpush1.msra.mxu0 0.0
  %79 = vmatprep.subr.mxu0 0.0
  %80 = vmatpush1.msra.mxu0 0.0
  %81 = vmatprep.subr.mxu0 0.0
  %82 = vmatpush1.msra.mxu0 0.0
  %83 = vmatprep.subr.mxu0 0.0
  %84 = vmatpush1.msra.mxu0 0.0
  %85 = vmatprep.subr.mxu0 0.0
  %86 = vmatpush1.msra.mxu0 0.0
  %87 = vmatprep.subr.mxu0 0.0
  %88 = vmatpush1.msra.mxu0 0.0
  %89 = vmatprep.subr.mxu0 0.0
  %90 = vmatpush1.msra.mxu0 0.0
  %91 = vmatprep.subr.mxu0 0.0
  %92 = vmatpush1.msra.mxu0 0.0
  %93 = vmatprep.subr.mxu0 0.0
  %94 = vmatpush1.msra.mxu0 0.0
  %95 = vmatprep.subr.mxu0 0.0
  %96 = vmatpush1.msra.mxu0 0.0
  %97 = vmatprep.subr.mxu0 0.0
  %98 = vmatpush1.msra.mxu0 0.0
  %99 = vmatprep.subr.mxu0 0.0
  %100 = vmatpush1.msra.mxu0 0.0
  %101 = vmatprep.subr.mxu0 0.0
  %102 = vmatpush1.msra.mxu0 0.0
  %103 = vmatprep.subr.mxu0 0.0
  %104 = vmatpush1.msra.mxu0 0.0
  %105 = vmatprep.subr.mxu0 0.0
  %106 = vmatpush1.msra.mxu0 0.0
  %107 = vmatprep.subr.mxu0 0.0
  %108 = vmatpush1.msra.mxu0 0.0
  %109 = vmatprep.subr.mxu0 0.0
  %110 = vmatpush1.msra.mxu0 0.0
  %111 = vmatprep.subr.mxu0 0.0
  %112 = vmatpush1.msra.mxu0 0.0
  %113 = vmatprep.subr.mxu0 0.0
  %114 = vmatpush1.msra.mxu0 0.0
  %115 = vmatprep.subr.mxu0 0.0
  %116 = vmatpush1.msra.mxu0 0.0
  %117 = vmatprep.subr.mxu0 0.0
  %118 = vmatpush1.msra.mxu0 0.0
  %119 = vmatprep.subr.mxu0 0.0
  %120 = vmatpush1.msra.mxu0 0.0
  %121 = vmatprep.subr.mxu0 0.0
  %122 = vmatpush1.msra.mxu0 0.0
  %123 = vmatprep.subr.mxu0 0.0
  %124 = vmatpush1.msra.mxu0 0.0
  %125 = vmatprep.subr.mxu0 0.0
  %126 = vmatpush1.msra.mxu0 0.0
  %127 = vmatprep.subr.mxu0 0.0
  %128 = vmatpush1.msra.mxu0 0.0
  %129 = vmatprep.subr.mxu0 0.0
  %130 = vmatpush1.msra.mxu0 0.0
  %131 = vmatprep.subr.mxu0 0.0
  %132 = vmatpush1.msra.mxu0 0.0
  %133 = vmatprep.mubr.f32.mxu0 0.0
  %134 = vmatmul.mubr.f32.gmra.mrb[0].mxu0 %v67
  %v135 = vpop.f32.mrb[0].mxu0
  %v136 = vadd.f32 0.0, %v135
  %v137 = vpop.f32.mrb[0].mxu0
  %138 = vdwg.mxu0
  %v139 = vld [vmem:[%s0 + $0x2] sm:$0x1]
  %v140 = vlaneseq
  %v141 = vshrl.u32 %v140, 7
  %v142 = vsub.s32 0, %v141
  %v143 = vrot.slane %v139, %v142
  %v144 = vld [vmem:[%s0 + $0x5] sm:$0x1]
  %v145 = vlaneseq
  %v146 = vshrl.u32 %v145, 7
  %v147 = vsub.s32 0, %v146
  %v148 = vrot.slane %v144, %v147
  %v149 = vsel %vm26, %v143, %v148
  %v150 = vmul.f32 %v136, %v149
  %s151 = scalar_lea.vmem %s3, 8
  %v152 = vld [vmem:[%s151] sm:$0xff]
  %v154 = vsel %vm65, %v152, 0
  %156 = vmatprep.subr.mxu0 0.0
  %157 = vmatpush1.msra.mxu0 %v136
  %158 = vmatprep.subr.mxu0 0.0
  %159 = vmatpush1.msra.mxu0 %v150
  %160 = vmatprep.subr.mxu0 0.0
  %161 = vmatpush1.msra.mxu0 0.0
  %162 = vmatprep.subr.mxu0 0.0
  %163 = vmatpush1.msra.mxu0 0.0
  %164 = vmatprep.subr.mxu0 0.0
  %165 = vmatpush1.msra.mxu0 0.0
  %166 = vmatprep.subr.mxu0 0.0
  %167 = vmatpush1.msra.mxu0 0.0
  %168 = vmatprep.subr.mxu0 0.0
  %169 = vmatpush1.msra.mxu0 0.0
  %170 = vmatprep.subr.mxu0 0.0
  %171 = vmatpush1.msra.mxu0 0.0
  %172 = vmatprep.subr.mxu0 0.0
  %173 = vmatpush1.msra.mxu0 0.0
  %174 = vmatprep.subr.mxu0 0.0
  %175 = vmatpush1.msra.mxu0 0.0
  %176 = vmatprep.subr.mxu0 0.0
  %177 = vmatpush1.msra.mxu0 0.0
  %178 = vmatprep.subr.mxu0 0.0
  %179 = vmatpush1.msra.mxu0 0.0
  %180 = vmatprep.subr.mxu0 0.0
  %181 = vmatpush1.msra.mxu0 0.0
  %182 = vmatprep.subr.mxu0 0.0
  %183 = vmatpush1.msra.mxu0 0.0
  %184 = vmatprep.subr.mxu0 0.0
  %185 = vmatpush1.msra.mxu0 0.0
  %186 = vmatprep.subr.mxu0 0.0
  %187 = vmatpush1.msra.mxu0 0.0
  %188 = vmatprep.subr.mxu0 0.0
  %189 = vmatpush1.msra.mxu0 0.0
  %190 = vmatprep.subr.mxu0 0.0
  %191 = vmatpush1.msra.mxu0 0.0
  %192 = vmatprep.subr.mxu0 0.0
  %193 = vmatpush1.msra.mxu0 0.0
  %194 = vmatprep.subr.mxu0 0.0
  %195 = vmatpush1.msra.mxu0 0.0
  %196 = vmatprep.subr.mxu0 0.0
  %197 = vmatpush1.msra.mxu0 0.0
  %198 = vmatprep.subr.mxu0 0.0
  %199 = vmatpush1.msra.mxu0 0.0
  %200 = vmatprep.subr.mxu0 0.0
  %201 = vmatpush1.msra.mxu0 0.0
  %202 = vmatprep.subr.mxu0 0.0
  %203 = vmatpush1.msra.mxu0 0.0
  %204 = vmatprep.subr.mxu0 0.0
  %205 = vmatpush1.msra.mxu0 0.0
  %206 = vmatprep.subr.mxu0 0.0
  %207 = vmatpush1.msra.mxu0 0.0
  %208 = vmatprep.subr.mxu0 0.0
  %209 = vmatpush1.msra.mxu0 0.0
  %210 = vmatprep.subr.mxu0 0.0
  %211 = vmatpush1.msra.mxu0 0.0
  %212 = vmatprep.subr.mxu0 0.0
  %213 = vmatpush1.msra.mxu0 0.0
  %214 = vmatprep.subr.mxu0 0.0
  %215 = vmatpush1.msra.mxu0 0.0
  %216 = vmatprep.subr.mxu0 0.0
  %217 = vmatpush1.msra.mxu0 0.0
  %218 = vmatprep.subr.mxu0 0.0
  %219 = vmatpush1.msra.mxu0 0.0
  %220 = vmatprep.mubr.f32.mxu0 0.0
  %221 = vmatmul.mubr.f32.gmra.mrb[0].mxu0 %v154
  %v222 = vpop.f32.mrb[0].mxu0
  %v223 = vadd.f32 0.0, %v222
  %v224 = vpop.f32.mrb[0].mxu0
  %225 = vdwg.mxu0
  %v226 = vld [vmem:[%s0 + $0x3] sm:$0x1]
  %v227 = vlaneseq
  %v228 = vshrl.u32 %v227, 7
  %v229 = vsub.s32 0, %v228
  %v230 = vrot.slane %v226, %v229
  %v231 = vld [vmem:[%s0 + $0x4] sm:$0x1]
  %v232 = vlaneseq
  %v233 = vshrl.u32 %v232, 7
  %v234 = vsub.s32 0, %v233
  %v235 = vrot.slane %v231, %v234
  %v236 = vsel %vm26, %v230, %v235
  %v237 = vmul.f32 %v223, %v236
  %v238 = vld [vmem:[%s4] sm:$0xff]
  %v239 = vld [vmem:[%s4 + $0x8] sm:$0xff]
  %v241 = vsel %vm65, %v238, 0
  %v244 = vsel %vm65, %v239, 0
  %246 = vmatprep.subr.mxu0 0.0
  %247 = vmatpush1.msra.mxu0 %v223
  %248 = vmatprep.subr.mxu0 0.0
  %249 = vmatpush1.msra.mxu0 %v237
  %250 = vmatprep.subr.mxu0 0.0
  %251 = vmatpush1.msra.mxu0 0.0
  %252 = vmatprep.subr.mxu0 0.0
  %253 = vmatpush1.msra.mxu0 0.0
  %254 = vmatprep.subr.mxu0 0.0
  %255 = vmatpush1.msra.mxu0 0.0
  %256 = vmatprep.subr.mxu0 0.0
  %257 = vmatpush1.msra.mxu0 0.0
  %258 = vmatprep.subr.mxu0 0.0
  %259 = vmatpush1.msra.mxu0 0.0
  %260 = vmatprep.subr.mxu0 0.0
  %261 = vmatpush1.msra.mxu0 0.0
  %262 = vmatprep.subr.mxu0 0.0
  %263 = vmatpush1.msra.mxu0 0.0
  %264 = vmatprep.subr.mxu0 0.0
  %265 = vmatpush1.msra.mxu0 0.0
  %266 = vmatprep.subr.mxu0 0.0
  %267 = vmatpush1.msra.mxu0 0.0
  %268 = vmatprep.subr.mxu0 0.0
  %269 = vmatpush1.msra.mxu0 0.0
  %270 = vmatprep.subr.mxu0 0.0
  %271 = vmatpush1.msra.mxu0 0.0
  %272 = vmatprep.subr.mxu0 0.0
  %273 = vmatpush1.msra.mxu0 0.0
  %274 = vmatprep.subr.mxu0 0.0
  %275 = vmatpush1.msra.mxu0 0.0
  %276 = vmatprep.subr.mxu0 0.0
  %277 = vmatpush1.msra.mxu0 0.0
  %278 = vmatprep.subr.mxu0 0.0
  %279 = vmatpush1.msra.mxu0 0.0
  %280 = vmatprep.subr.mxu0 0.0
  %281 = vmatpush1.msra.mxu0 0.0
  %282 = vmatprep.subr.mxu0 0.0
  %283 = vmatpush1.msra.mxu0 0.0
  %284 = vmatprep.subr.mxu0 0.0
  %285 = vmatpush1.msra.mxu0 0.0
  %286 = vmatprep.subr.mxu0 0.0
  %287 = vmatpush1.msra.mxu0 0.0
  %288 = vmatprep.subr.mxu0 0.0
  %289 = vmatpush1.msra.mxu0 0.0
  %290 = vmatprep.subr.mxu0 0.0
  %291 = vmatpush1.msra.mxu0 0.0
  %292 = vmatprep.subr.mxu0 0.0
  %293 = vmatpush1.msra.mxu0 0.0
  %294 = vmatprep.subr.mxu0 0.0
  %295 = vmatpush1.msra.mxu0 0.0
  %296 = vmatprep.subr.mxu0 0.0
  %297 = vmatpush1.msra.mxu0 0.0
  %298 = vmatprep.subr.mxu0 0.0
  %299 = vmatpush1.msra.mxu0 0.0
  %300 = vmatprep.subr.mxu0 0.0
  %301 = vmatpush1.msra.mxu0 0.0
  %302 = vmatprep.subr.mxu0 0.0
  %303 = vmatpush1.msra.mxu0 0.0
  %304 = vmatprep.subr.mxu0 0.0
  %305 = vmatpush1.msra.mxu0 0.0
  %306 = vmatprep.subr.mxu0 0.0
  %307 = vmatpush1.msra.mxu0 0.0
  %308 = vmatprep.subr.mxu0 0.0
  %309 = vmatpush1.msra.mxu0 0.0
  %310 = vmatprep.mubr.f32.mxu0 0.0
  %311 = vmatmul.mubr.f32.gmra.mrb[0].mxu0 %v241
  %v312 = vpop.f32.mrb[0].mxu0
  %v313 = vadd.f32 0.0, %v312
  %v314 = vpop.f32.mrb[0].mxu0
  %315 = vmatprep.mubr.f32.mxu0 0.0
  %316 = vmatmul.mubr.f32.gmra.mrb[0].mxu0 %v244
  %v317 = vpop.f32.mrb[0].mxu0
  %v318 = vadd.f32 0.0, %v317
  %v319 = vpop.f32.mrb[0].mxu0
  %320 = vdwg.mxu0
  %v321 = vmul.f32 %v313, %v223
  %v322 = vmul.f32 %v318, %v237
  %v323 = vadd.f32 %v321, %v322
  %v324 = vrot.slane %v323, 4
  %v325 = vadd.f32 %v323, %v324
  %v326 = vrot.slane %v325, 2
  %v327 = vadd.f32 %v325, %v326
  %v328 = vrot.slane %v327, 1
  %v329 = vadd.f32 %v327, %v328
  %s330 = sld [smem:[#allocation2]]
  %v331 = vstv %s330
  %v332 = vadd.f32 %v329, %v331
  %333 = vst [vmem:[%s6] sm:$0x1] %v332
  // Predicated region
  $region26: #{_forward.1} parent=0 // pred_check
    _
  $region27: #{_forward.1} parent=0 // pred_check_branch
    %335 = sbr.rel (0) target = $region29
  $region28: #{_forward.1} parent=0 // pred_region
    _
  $region29: #{_forward.1} parent=0 // pred_fallthru
    _
  // Predicated region
  $region30: #{_forward.1} parent=0 // pred_check
    _
  $region31: #{_forward.1} parent=0 // pred_check_branch
    %337 = sbr.rel (0) target = $region33
  $region32: #{_forward.1} parent=0 // pred_region
    _
  $region33: #{_forward.1} parent=0 // pred_fallthru
    _

</llo_original>
